<compile_context>
chip_gen: v5e
topology: v5e:2x2
jax: 0.10.0
libtpu: 0.0.40
codegen_flags: <defaults>
</compile_context>

<pallas_src>
import functools

import jax
import jax.numpy as jnp
from jax.experimental import pallas as pl
from jax.experimental.pallas import tpu as pltpu


def highway_fused_kernel(x_ref, w_ref, b_ref, o_ref, *, num_layers, non_lin):
    """All highway layers applied to one (tm, Dp) tile of rows.

    x_ref: (tm, Dp)            activation rows (Dp = D padded to mult of 128)
    w_ref: (L, Dp, 2*Dp)       fused [Wh^T | Wt^T] per layer (padded, resident)
    b_ref: (L, 1, 2*Dp)        fused [bh | bt] per layer
    o_ref: (tm, Dp)            output rows
    """
    y = x_ref[...].astype(jnp.float32)                    # (tm, Dp)
    dp = y.shape[-1]

    # num_layers is small and static -> unrolled Python loop.
    for layer in range(num_layers):
        w = w_ref[layer]                                  # (Dp, 2*Dp)
        b = b_ref[layer]                                  # (1, 2*Dp)
        # Single fused matmul for both the H and T branches.
        z = jnp.dot(y, w, preferred_element_type=jnp.float32) + b
        h_logits = z[:, :dp]                              # lane-aligned slice
        t_logits = z[:, dp:]
        if non_lin == "relu":
            h = jnp.maximum(h_logits, 0.0)
        else:  # 'tanh'
            h = jnp.tanh(h_logits)
        t = jax.nn.sigmoid(t_logits)                      # transform gate (EUP)
        # Highway combine: h*t + y*(1-t) == y + t*(h - y)  (fewer VPU ops).
        y = y + t * (h - y)
        # Dropout: identity in eval mode (no RNG applied at inference).

    o_ref[...] = y.astype(o_ref.dtype)


def highway_network(x, params, *, tm=256, non_lin="relu"):
    """x: (B, S, D) float.  params: list of dicts with wh_t, bh, wt_t, bt."""
    assert non_lin in ("relu", "tanh")
    B, S, D = x.shape
    M = B * S
    L = len(params)

    # Lane-dense feature dim and row-tile sizing (handles any M, D).
    Dp = ((D + 127) // 128) * 128
    tm = max(8, min(tm, ((M + 7) // 8) * 8))      # don't over-tile tiny inputs
    Mp = ((M + tm - 1) // tm) * tm

    # Build fused, padded, stacked weights: (L, Dp, 2*Dp) and biases (L, 1, 2*Dp).
    # Columns [0, Dp) -> H branch, columns [Dp, 2*Dp) -> T branch.
    w_stack = jnp.zeros((L, Dp, 2 * Dp), jnp.float32)
    b_stack = jnp.zeros((L, 1, 2 * Dp), jnp.float32)
    for l, p in enumerate(params):
        w_stack = w_stack.at[l, :D, :D].set(p["wh_t"].astype(jnp.float32))
        w_stack = w_stack.at[l, :D, Dp:Dp + D].set(p["wt_t"].astype(jnp.float32))
        b_stack = b_stack.at[l, 0, :D].set(p["bh"].astype(jnp.float32))
        b_stack = b_stack.at[l, 0, Dp:Dp + D].set(p["bt"].astype(jnp.float32))

    # Zero-pad activations; padded lanes/rows stay harmless (sliced off below).
    x2d = x.reshape(M, D).astype(jnp.float32)
    x_pad = jnp.zeros((Mp, Dp), jnp.float32).at[:M, :D].set(x2d)

    kernel = functools.partial(
        highway_fused_kernel, num_layers=L, non_lin=non_lin
    )

    out = pl.pallas_call(
        kernel,
        out_shape=jax.ShapeDtypeStruct((Mp, Dp), jnp.float32),
        grid_spec=pltpu.PrefetchScalarGridSpec(
            num_scalar_prefetch=0,
            grid=(Mp // tm,),
            in_specs=[
                pl.BlockSpec((tm, Dp), lambda i: (i, 0)),           # x rows tile
                pl.BlockSpec((L, Dp, 2 * Dp), lambda i: (0, 0, 0)),  # weights (resident)
                pl.BlockSpec((L, 1, 2 * Dp), lambda i: (0, 0, 0)),   # biases (resident)
            ],
            out_specs=pl.BlockSpec((tm, Dp), lambda i: (i, 0)),
        ),
        compiler_params=pltpu.CompilerParams(
            dimension_semantics=("parallel",),        # shards rows across TCs on v7x
            vmem_limit_bytes=64 * 1024 * 1024,
        ),
    )(x_pad, w_stack, b_stack)

    return out[:M, :D].reshape(B, S, D).astype(x.dtype)


def init_highway_params(key, d_emb, num_layers=2):
    """Deterministic synthetic parameter init (PyTorch Linear-like shapes)."""
    params = []
    for layer in range(num_layers):
        k = jax.random.fold_in(key, layer)
        k_wh, k_bh, k_wt, k_bt = jax.random.split(k, 4)
        scale = 1.0 / jnp.sqrt(d_emb)
        # PyTorch Linear weight is (out, in); we store the transpose (in, out).
        wh = jax.random.uniform(k_wh, (d_emb, d_emb), jnp.float32, -scale, scale)
        bh = jax.random.uniform(k_bh, (d_emb,), jnp.float32, -scale, scale)
        wt = jax.random.uniform(k_wt, (d_emb, d_emb), jnp.float32, -scale, scale)
        bt = jax.random.uniform(k_bt, (d_emb,), jnp.float32, -scale, scale)
        params.append({"wh_t": wh.T, "bh": bh, "wt_t": wt.T, "bt": bt})
    return params


def highway_network_ref(x, params, non_lin="relu"):
    """Pure-JAX reference for correctness checking."""
    B, S, D = x.shape
    y = x.reshape(B * S, D)
    for p in params:
        h_logits = y @ p["wh_t"] + p["bh"]
        h = jnp.maximum(h_logits, 0.0) if non_lin == "relu" else jnp.tanh(h_logits)
        t = jax.nn.sigmoid(y @ p["wt_t"] + p["bt"])
        y = h * t + y * (1.0 - t)
    return y.reshape(B, S, D)


if __name__ == "__main__":
    key = jax.random.PRNGKey(0)
    k_x, k_p = jax.random.split(key)

    B, S, D = 2, 8, 32          # batch, seq, d_emb
    num_layers = 2
    dropout_rate = 0.1          # unused at inference (eval mode => identity)
    # TODO(synk): dropout is omitted (inference/eval-mode forward only).

    x = jax.random.normal(k_x, (B, S, D), dtype=jnp.float32)
    params = init_highway_params(k_p, D, num_layers=num_layers)

    y = highway_network(x, params)
    y = jax.block_until_ready(y)

    y_ref = highway_network_ref(x, params)
    assert y.shape == (B, S, D)
    assert jnp.allclose(y, y_ref, atol=1e-5, rtol=1e-5)

    print("KERNEL_OK")
</pallas_src>

<mosaic_0001>
module attributes {stable_mosaic.version = 11 : i64} {
  func.func @highway_fused_kernel(%arg0: i32, %arg1: memref<16x128xf32, #tpu.memory_space<vmem>>, %arg2: memref<2x128x256xf32, #tpu.memory_space<vmem>>, %arg3: memref<2x1x256xf32, #tpu.memory_space<vmem>>, %arg4: memref<16x128xf32, #tpu.memory_space<vmem>>) attributes {dimension_semantics = [#tpu.dimension_semantics<parallel>], iteration_bounds = array<i64: 1>, scalar_prefetch = 0 : i64, scratch_operands = 0 : i64, tpu.core_type = #tpu.core_type<tc>, window_params = [{transform_indices = @transform_0, window_bounds = array<i64: 16, 128>}, {pipeline_mode = #tpu.pipeline_mode<synchronous>, transform_indices = @transform_1, window_bounds = array<i64: 2, 128, 256>}, {pipeline_mode = #tpu.pipeline_mode<synchronous>, transform_indices = @transform_2, window_bounds = array<i64: 2, 1, 256>}, {transform_indices = @transform_3, window_bounds = array<i64: 16, 128>}]} {
    %c0 = arith.constant 0 : index
    %c0_0 = arith.constant 0 : index
    %0 = vector.load %arg1[%c0, %c0_0] : memref<16x128xf32, #tpu.memory_space<vmem>>, vector<16x128xf32>
    %c0_1 = arith.constant 0 : index
    %c0_2 = arith.constant 0 : index
    %c0_3 = arith.constant 0 : index
    %1 = vector.load %arg2[%c0_1, %c0_2, %c0_3] : memref<2x128x256xf32, #tpu.memory_space<vmem>>, vector<1x128x256xf32>
    %2 = vector.shape_cast %1 : vector<1x128x256xf32> to vector<128x256xf32>
    %c0_4 = arith.constant 0 : index
    %c0_5 = arith.constant 0 : index
    %c0_6 = arith.constant 0 : index
    %3 = vector.load %arg3[%c0_4, %c0_5, %c0_6] : memref<2x1x256xf32, #tpu.memory_space<vmem>>, vector<1x1x256xf32>
    %4 = vector.shape_cast %3 : vector<1x1x256xf32> to vector<1x256xf32>
    %cst = arith.constant dense<0.000000e+00> : vector<16x256xf32>
    %5 = tpu.matmul %0, %2, %cst {dimension_numbers = #tpu.dot_dimension_numbers<[1], [0], [0], [1], [0, 0, 1, 1], [], []>} : vector<16x128xf32>, vector<128x256xf32>, vector<16x256xf32> -> vector<16x256xf32>
    %6 = vector.broadcast %4 : vector<1x256xf32> to vector<16x256xf32>
    %7 = arith.addf %5, %6 : vector<16x256xf32>
    %8 = vector.extract_strided_slice %7 {offsets = [0, 0], sizes = [16, 128], strides = [1, 1]} : vector<16x256xf32> to vector<16x128xf32>
    %9 = vector.extract_strided_slice %7 {offsets = [0, 128], sizes = [16, 128], strides = [1, 1]} : vector<16x256xf32> to vector<16x128xf32>
    %cst_7 = arith.constant 0.000000e+00 : f32
    %10 = vector.broadcast %cst_7 : f32 to vector<16x128xf32>
    %11 = arith.maximumf %8, %10 : vector<16x128xf32>
    %12 = arith.negf %9 : vector<16x128xf32>
    %13 = math.exp %12 : vector<16x128xf32>
    %cst_8 = arith.constant 1.000000e+00 : f32
    %14 = vector.broadcast %cst_8 : f32 to vector<16x128xf32>
    %15 = arith.addf %14, %13 : vector<16x128xf32>
    %16 = arith.divf %14, %15 : vector<16x128xf32>
    %17 = arith.subf %11, %0 : vector<16x128xf32>
    %18 = arith.mulf %16, %17 : vector<16x128xf32>
    %19 = arith.addf %0, %18 : vector<16x128xf32>
    %c1 = arith.constant 1 : index
    %c0_9 = arith.constant 0 : index
    %c0_10 = arith.constant 0 : index
    %20 = vector.load %arg2[%c1, %c0_9, %c0_10] : memref<2x128x256xf32, #tpu.memory_space<vmem>>, vector<1x128x256xf32>
    %21 = vector.shape_cast %20 : vector<1x128x256xf32> to vector<128x256xf32>
    %c1_11 = arith.constant 1 : index
    %c0_12 = arith.constant 0 : index
    %c0_13 = arith.constant 0 : index
    %22 = vector.load %arg3[%c1_11, %c0_12, %c0_13] : memref<2x1x256xf32, #tpu.memory_space<vmem>>, vector<1x1x256xf32>
    %23 = vector.shape_cast %22 : vector<1x1x256xf32> to vector<1x256xf32>
    %cst_14 = arith.constant dense<0.000000e+00> : vector<16x256xf32>
    %24 = tpu.matmul %19, %21, %cst_14 {dimension_numbers = #tpu.dot_dimension_numbers<[1], [0], [0], [1], [0, 0, 1, 1], [], []>} : vector<16x128xf32>, vector<128x256xf32>, vector<16x256xf32> -> vector<16x256xf32>
    %25 = vector.broadcast %23 : vector<1x256xf32> to vector<16x256xf32>
    %26 = arith.addf %24, %25 : vector<16x256xf32>
    %27 = vector.extract_strided_slice %26 {offsets = [0, 0], sizes = [16, 128], strides = [1, 1]} : vector<16x256xf32> to vector<16x128xf32>
    %28 = vector.extract_strided_slice %26 {offsets = [0, 128], sizes = [16, 128], strides = [1, 1]} : vector<16x256xf32> to vector<16x128xf32>
    %cst_15 = arith.constant 0.000000e+00 : f32
    %29 = vector.broadcast %cst_15 : f32 to vector<16x128xf32>
    %30 = arith.maximumf %27, %29 : vector<16x128xf32>
    %31 = arith.negf %28 : vector<16x128xf32>
    %32 = math.exp %31 : vector<16x128xf32>
    %cst_16 = arith.constant 1.000000e+00 : f32
    %33 = vector.broadcast %cst_16 : f32 to vector<16x128xf32>
    %34 = arith.addf %33, %32 : vector<16x128xf32>
    %35 = arith.divf %33, %34 : vector<16x128xf32>
    %36 = arith.subf %30, %19 : vector<16x128xf32>
    %37 = arith.mulf %35, %36 : vector<16x128xf32>
    %38 = arith.addf %19, %37 : vector<16x128xf32>
    %c0_17 = arith.constant 0 : index
    %c0_18 = arith.constant 0 : index
    %39 = vector.load %arg4[%c0_17, %c0_18] : memref<16x128xf32, #tpu.memory_space<vmem>>, vector<16x128xf32>
    tpu.vector_store %arg4[%c0_17, %c0_18], %38 {strides = array<i32>} : memref<16x128xf32, #tpu.memory_space<vmem>>, vector<16x128xf32>,
    return
  }
  func.func @transform_0(%arg0: i32) -> (i32, i32) {
    %c0_i32 = arith.constant 0 : i32
    %c0_i32_0 = arith.constant 0 : i32
    return %arg0, %c0_i32 : i32, i32
  }
  func.func @transform_1(%arg0: i32) -> (i32, i32, i32) {
    %c0_i32 = arith.constant 0 : i32
    %c0_i32_0 = arith.constant 0 : i32
    %c0_i32_1 = arith.constant 0 : i32
    %c0_i32_2 = arith.constant 0 : i32
    return %c0_i32, %c0_i32_0, %c0_i32_1 : i32, i32, i32
  }
  func.func @transform_2(%arg0: i32) -> (i32, i32, i32) {
    %c0_i32 = arith.constant 0 : i32
    %c0_i32_0 = arith.constant 0 : i32
    %c0_i32_1 = arith.constant 0 : i32
    %c0_i32_2 = arith.constant 0 : i32
    return %c0_i32, %c0_i32_0, %c0_i32_1 : i32, i32, i32
  }
  func.func @transform_3(%arg0: i32) -> (i32, i32) {
    %c0_i32 = arith.constant 0 : i32
    %c0_i32_0 = arith.constant 0 : i32
    return %arg0, %c0_i32 : i32, i32
  }
}

</mosaic_0001>

<llo_original>
// kernel: tpu_custom_call.1
$region0: #{tpu_custom_call.1}
  #allocation0 [shape = 'u32[]', space=smem, size = 0x4, offset = 0x4, fixed_abs, tag = 'smem constant byte address 0x4 - core index']
  #allocation1 [shape = 'u32[72,128]{1,0:T(1,128)}', space=vmem, size = 0x9000, scoped, tag = 'internal scratch']
  %s0 = inlined_call_operand.hbm [shape: f32[16,128], index: 0, kind: input, shape index: {}]
  %s1 = inlined_call_operand.hbm [shape: f32[2,128,256], index: 1, kind: input, shape index: {}]
  %s2 = inlined_call_operand.hbm [shape: f32[2,1,256], index: 2, kind: input, shape index: {}]
  %s3 = inlined_call_operand.hbm [shape: f32[16,128], index: 3, kind: output, shape index: {}]
  %s4 = sld [smem:[#allocation0]]
  $region34: #{tpu_custom_call.1} parent=0
    _
  %s6 = ssub.s32 1, %s4
  %s7 = scalar_select 0, %s6, %s4
  $region1: #{tpu_custom_call.1} parent=0
    #allocation2 [shape = 'u8[8192]{0}', space=vmem, size = 0x2000, scoped, tag = 'input window, operand 0, single buffered']
    #allocation3 [shape = 's32[1]{0}', space=sflag, size = 0x4, scoped, tag = 'scoped memory for tpu_custom_call.1']
    #allocation4 [shape = 's32[1]{0}', space=sflag, size = 0x4, scoped, tag = 'scoped memory for tpu_custom_call.1']
    #allocation5 [shape = 'u8[262144]{0}', space=vmem, size = 0x40000, scoped, tag = 'input window, operand 1, single buffered']
    #allocation6 [shape = 's32[1]{0}', space=sflag, size = 0x4, scoped, tag = 'scoped memory for tpu_custom_call.1']
    #allocation7 [shape = 'u8[2048]{0}', space=vmem, size = 0x800, scoped, tag = 'input window, operand 2, single buffered']
    #allocation8 [shape = 'u8[8192]{0}', space=vmem, size = 0x2000, scoped, tag = 'output window, operand 0, single buffered']
    %8 = vsyncpa [#allocation3], 0
    %9 = vsyncpa [#allocation6], 0
    %10 = vsyncpa [#allocation4], 0
    // Predicated region
    $region2: #{tpu_custom_call.1} parent=1 // pred_check
      _
    $region3: #{tpu_custom_call.1} parent=1 // pred_check_branch
      %12 = sbr.rel (0) target = $region5
    $region4: #{tpu_custom_call.1} parent=1 // pred_region
      %14 = vsyncadd [#allocation3], 0
      %s15 = sshll.u32 %s0, 4
      %s16 = int_to_ptr.hbm [resolvable:$true] %s15
      %s17 = sshll.u32 [#allocation2], 4
      %s18 = int_to_ptr.vmem [resolvable:$true] %s17
      %23 = dma.hbm_to_vmem [thread:$0]  %s16, 256, %s18, [#allocation3], 128, 128, 8
    $region5: #{tpu_custom_call.1} parent=1 // pred_fallthru
      _
    // Predicated region
    $region6: #{tpu_custom_call.1} parent=1 // pred_check
      _
    $region7: #{tpu_custom_call.1} parent=1 // pred_check_branch
      %25 = sbr.rel (0) target = $region9
    $region8: #{tpu_custom_call.1} parent=1 // pred_region
      %27 = vsyncadd [#allocation6], 0
      %s28 = sshll.u32 %s1, 4
      %s29 = int_to_ptr.hbm [resolvable:$true] %s28
      %s30 = sshll.u32 [#allocation5], 4
      %s31 = int_to_ptr.vmem [resolvable:$true] %s30
      %36 = dma.hbm_to_vmem [thread:$0]  %s29, 8192, %s31, [#allocation6], 256, 256, 16
    $region9: #{tpu_custom_call.1} parent=1 // pred_fallthru
      _
    // Predicated region
    $region10: #{tpu_custom_call.1} parent=1 // pred_check
      _
    $region11: #{tpu_custom_call.1} parent=1 // pred_check_branch
      %38 = sbr.rel (0) target = $region13
    $region12: #{tpu_custom_call.1} parent=1 // pred_region
      %40 = vsyncadd [#allocation6], 0
      %s41 = sshll.u32 %s2, 4
      %s42 = int_to_ptr.hbm [resolvable:$true] %s41
      %s43 = sshll.u32 [#allocation7], 4
      %s44 = int_to_ptr.vmem [resolvable:$true] %s43
      %49 = dma.hbm_to_vmem [thread:$0]  %s42, 64, %s44, [#allocation6], 32, 32, 2
    $region13: #{tpu_custom_call.1} parent=1 // pred_fallthru
      _
    // Predicated region
    $region14: #{tpu_custom_call.1} parent=1 // pred_check
      _
    $region15: #{tpu_custom_call.1} parent=1 // pred_check_branch
      %51 = sbr.rel (0) target = $region17
    $region16: #{tpu_custom_call.1} parent=1 // pred_region
      %53 = dma.done [#allocation3], 256
    $region17: #{tpu_custom_call.1} parent=1 // pred_fallthru
      _
    // Predicated region
    $region18: #{tpu_custom_call.1} parent=1 // pred_check
      _
    $region19: #{tpu_custom_call.1} parent=1 // pred_check_branch
      %55 = sbr.rel (0) target = $region21
    $region20: #{tpu_custom_call.1} parent=1 // pred_region
      %57 = dma.done [#allocation6], 8192
    $region21: #{tpu_custom_call.1} parent=1 // pred_fallthru
      _
    // Predicated region
    $region22: #{tpu_custom_call.1} parent=1 // pred_check
      _
    $region23: #{tpu_custom_call.1} parent=1 // pred_check_branch
      %59 = sbr.rel (0) target = $region25
    $region24: #{tpu_custom_call.1} parent=1 // pred_region
      %61 = dma.done [#allocation6], 64
    $region25: #{tpu_custom_call.1} parent=1 // pred_fallthru
      _
    %v62 = vld [vmem:[#allocation2] sm:$0xff]
    %v63 = vld [vmem:[#allocation2 + $0x8] sm:$0xff]
    %v64 = vld [vmem:[#allocation5] sm:$0xff]
    %v65 = vld [vmem:[#allocation5 + $0x8] sm:$0xff]
    %v66 = vld [vmem:[#allocation5 + $0x10] sm:$0xff]
    %v67 = vld [vmem:[#allocation5 + $0x18] sm:$0xff]
    %v68 = vld [vmem:[#allocation5 + $0x20] sm:$0xff]
    %v69 = vld [vmem:[#allocation5 + $0x28] sm:$0xff]
    %v70 = vld [vmem:[#allocation5 + $0x30] sm:$0xff]
    %v71 = vld [vmem:[#allocation5 + $0x38] sm:$0xff]
    %v72 = vld [vmem:[#allocation5 + $0x40] sm:$0xff]
    %v73 = vld [vmem:[#allocation5 + $0x48] sm:$0xff]
    %v74 = vld [vmem:[#allocation5 + $0x50] sm:$0xff]
    %v75 = vld [vmem:[#allocation5 + $0x58] sm:$0xff]
    %v76 = vld [vmem:[#allocation5 + $0x60] sm:$0xff]
    %v77 = vld [vmem:[#allocation5 + $0x68] sm:$0xff]
    %v78 = vld [vmem:[#allocation5 + $0x70] sm:$0xff]
    %v79 = vld [vmem:[#allocation5 + $0x78] sm:$0xff]
    %v80 = vld [vmem:[#allocation5 + $0x80] sm:$0xff]
    %v81 = vld [vmem:[#allocation5 + $0x88] sm:$0xff]
    %v82 = vld [vmem:[#allocation5 + $0x90] sm:$0xff]
    %v83 = vld [vmem:[#allocation5 + $0x98] sm:$0xff]
    %v84 = vld [vmem:[#allocation5 + $0xa0] sm:$0xff]
    %v85 = vld [vmem:[#allocation5 + $0xa8] sm:$0xff]
    %v86 = vld [vmem:[#allocation5 + $0xb0] sm:$0xff]
    %v87 = vld [vmem:[#allocation5 + $0xb8] sm:$0xff]
    %v88 = vld [vmem:[#allocation5 + $0xc0] sm:$0xff]
    %v89 = vld [vmem:[#allocation5 + $0xc8] sm:$0xff]
    %v90 = vld [vmem:[#allocation5 + $0xd0] sm:$0xff]
    %v91 = vld [vmem:[#allocation5 + $0xd8] sm:$0xff]
    %v92 = vld [vmem:[#allocation5 + $0xe0] sm:$0xff]
    %v93 = vld [vmem:[#allocation5 + $0xe8] sm:$0xff]
    %v94 = vld [vmem:[#allocation5 + $0xf0] sm:$0xff]
    %v95 = vld [vmem:[#allocation5 + $0xf8] sm:$0xff]
    %v96 = vld [vmem:[#allocation7] sm:$0x3]
    %v98 = vperm.slane %v96, 0
    %v99 = vperm.slane %v96, 1
    %102 = vmatpush.msra.mxu0 %v94
    %103 = vmatpush.msra.mxu0 %v92
    %104 = vmatpush.msra.mxu0 %v90
    %105 = vmatpush.msra.mxu0 %v88
    %106 = vmatpush.msra.mxu0 %v86
    %107 = vmatpush.msra.mxu0 %v84
    %108 = vmatpush.msra.mxu0 %v82
    %109 = vmatpush.msra.mxu0 %v80
    %110 = vmatpush.msra.mxu0 %v78
    %111 = vmatpush.msra.mxu0 %v76
    %112 = vmatpush.msra.mxu0 %v74
    %113 = vmatpush.msra.mxu0 %v72
    %114 = vmatpush.msra.mxu0 %v70
    %115 = vmatpush.msra.mxu0 %v68
    %116 = vmatpush.msra.mxu0 %v66
    %117 = vmatpush.msra.mxu0 %v64
    %118 = vmatmul.f32.gmra.mxu0 %v62
    %v119 = vpop.f32.mrf.mxu0
    %v120 = vadd.f32 %v98, %v119
    %121 = vmatmul.f32.gmra.mxu0 %v63
    %v122 = vpop.f32.mrf.mxu0
    %v123 = vadd.f32 %v98, %v122
    %124 = vdwg.mxu0
    %125 = vmatpush.msra.mxu0 %v95
    %126 = vmatpush.msra.mxu0 %v93
    %127 = vmatpush.msra.mxu0 %v91
    %128 = vmatpush.msra.mxu0 %v89
    %129 = vmatpush.msra.mxu0 %v87
    %130 = vmatpush.msra.mxu0 %v85
    %131 = vmatpush.msra.mxu0 %v83
    %132 = vmatpush.msra.mxu0 %v81
    %133 = vmatpush.msra.mxu0 %v79
    %134 = vmatpush.msra.mxu0 %v77
    %135 = vmatpush.msra.mxu0 %v75
    %136 = vmatpush.msra.mxu0 %v73
    %137 = vmatpush.msra.mxu0 %v71
    %138 = vmatpush.msra.mxu0 %v69
    %139 = vmatpush.msra.mxu0 %v67
    %140 = vmatpush.msra.mxu0 %v65
    %141 = vmatmul.f32.gmra.mxu0 %v62
    %v142 = vpop.f32.mrf.mxu0
    %v143 = vadd.f32 %v99, %v142
    %144 = vmatmul.f32.gmra.mxu0 %v63
    %v145 = vpop.f32.mrf.mxu0
    %v146 = vadd.f32 %v99, %v145
    %147 = vdwg.mxu0
    %v148 = vmax.f32 %v120, 0.0
    %v149 = vmax.f32 %v123, 0.0
    %v150 = vxor.u32 %v143, 2147483648
    %v151 = vxor.u32 %v146, 2147483648
    %v152 = vmul.f32 %v150, 1.442695
    %v153 = vpow.pop %v152
    %v154 = vmul.f32 %v151, 1.442695
    %v155 = vpow.pop %v154
    %v156 = vadd.f32 %v153, 1.0
    %v157 = vadd.f32 %v155, 1.0
    %v158 = vrcp.pop %v156
    %v159 = vmul.f32 %v156, %v158
    %v160 = vsub.f32 1.0, %v159
    %v161 = vmul.f32 %v158, %v160
    %v162 = vadd.f32 %v158, %v161
    %vm163 = vweird.f32 %v156
    %vm164 = vweird.f32 %v158
    %vm165 = vmor %vm163, %vm164
    %v166 = vsel %vm165, %v158, %v162
    %v167 = vand.u32 2147483647, %v156
    %vm168 = vcmp.eq.f32.partialorder %v167, 8.507059e+37
    %v169 = vand.u32 %v156, 2147483648
    %v170 = vor.u32 1.1754944e-38, %v169
    %v171 = vsel %vm168, %v170, %v166
    %v172 = vmul.f32 1.0, %v171
    %v173 = vrcp.pop %v157
    %v174 = vmul.f32 %v157, %v173
    %v175 = vsub.f32 1.0, %v174
    %v176 = vmul.f32 %v173, %v175
    %v177 = vadd.f32 %v173, %v176
    %vm178 = vweird.f32 %v157
    %vm179 = vweird.f32 %v173
    %vm180 = vmor %vm178, %vm179
    %v181 = vsel %vm180, %v173, %v177
    %v182 = vand.u32 2147483647, %v157
    %vm183 = vcmp.eq.f32.partialorder %v182, 8.507059e+37
    %v184 = vand.u32 %v157, 2147483648
    %v185 = vor.u32 1.1754944e-38, %v184
    %v186 = vsel %vm183, %v185, %v181
    %v187 = vmul.f32 1.0, %v186
    %v188 = vsub.f32 %v148, %v62
    %v189 = vsub.f32 %v149, %v63
    %v190 = vmul.f32 %v172, %v188
    %v191 = vmul.f32 %v187, %v189
    %v192 = vadd.f32 %v62, %v190
    %v193 = vadd.f32 %v63, %v191
    %s194 = scalar_lea.vmem [#allocation5], 256
    %v195 = vld [vmem:[%s194] sm:$0xff]
    %v196 = vld [vmem:[%s194 + $0x8] sm:$0xff]
    %v197 = vld [vmem:[%s194 + $0x10] sm:$0xff]
    %v198 = vld [vmem:[%s194 + $0x18] sm:$0xff]
    %v199 = vld [vmem:[%s194 + $0x20] sm:$0xff]
    %v200 = vld [vmem:[%s194 + $0x28] sm:$0xff]
    %v201 = vld [vmem:[%s194 + $0x30] sm:$0xff]
    %v202 = vld [vmem:[%s194 + $0x38] sm:$0xff]
    %v203 = vld [vmem:[%s194 + $0x40] sm:$0xff]
    %v204 = vld [vmem:[%s194 + $0x48] sm:$0xff]
    %v205 = vld [vmem:[%s194 + $0x50] sm:$0xff]
    %v206 = vld [vmem:[%s194 + $0x58] sm:$0xff]
    %v207 = vld [vmem:[%s194 + $0x60] sm:$0xff]
    %v208 = vld [vmem:[%s194 + $0x68] sm:$0xff]
    %v209 = vld [vmem:[%s194 + $0x70] sm:$0xff]
    %v210 = vld [vmem:[%s194 + $0x78] sm:$0xff]
    %v211 = vld [vmem:[%s194 + $0x80] sm:$0xff]
    %v212 = vld [vmem:[%s194 + $0x88] sm:$0xff]
    %v213 = vld [vmem:[%s194 + $0x90] sm:$0xff]
    %v214 = vld [vmem:[%s194 + $0x98] sm:$0xff]
    %v215 = vld [vmem:[%s194 + $0xa0] sm:$0xff]
    %v216 = vld [vmem:[%s194 + $0xa8] sm:$0xff]
    %v217 = vld [vmem:[%s194 + $0xb0] sm:$0xff]
    %v218 = vld [vmem:[%s194 + $0xb8] sm:$0xff]
    %v219 = vld [vmem:[%s194 + $0xc0] sm:$0xff]
    %v220 = vld [vmem:[%s194 + $0xc8] sm:$0xff]
    %v221 = vld [vmem:[%s194 + $0xd0] sm:$0xff]
    %v222 = vld [vmem:[%s194 + $0xd8] sm:$0xff]
    %v223 = vld [vmem:[%s194 + $0xe0] sm:$0xff]
    %v224 = vld [vmem:[%s194 + $0xe8] sm:$0xff]
    %v225 = vld [vmem:[%s194 + $0xf0] sm:$0xff]
    %v226 = vld [vmem:[%s194 + $0xf8] sm:$0xff]
    %s227 = scalar_lea.vmem [#allocation7], 2
    %v228 = vld [vmem:[%s227] sm:$0x3]
    %v230 = vperm.slane %v228, 0
    %v231 = vperm.slane %v228, 1
    %234 = vmatpush.msra.mxu0 %v225
    %235 = vmatpush.msra.mxu0 %v223
    %236 = vmatpush.msra.mxu0 %v221
    %237 = vmatpush.msra.mxu0 %v219
    %238 = vmatpush.msra.mxu0 %v217
    %239 = vmatpush.msra.mxu0 %v215
    %240 = vmatpush.msra.mxu0 %v213
    %241 = vmatpush.msra.mxu0 %v211
    %242 = vmatpush.msra.mxu0 %v209
    %243 = vmatpush.msra.mxu0 %v207
    %244 = vmatpush.msra.mxu0 %v205
    %245 = vmatpush.msra.mxu0 %v203
    %246 = vmatpush.msra.mxu0 %v201
    %247 = vmatpush.msra.mxu0 %v199
    %248 = vmatpush.msra.mxu0 %v197
    %249 = vmatpush.msra.mxu0 %v195
    %250 = vmatmul.f32.gmra.mxu0 %v192
    %v251 = vpop.f32.mrf.mxu0
    %v252 = vadd.f32 %v230, %v251
    %253 = vmatmul.f32.gmra.mxu0 %v193
    %v254 = vpop.f32.mrf.mxu0
    %v255 = vadd.f32 %v230, %v254
    %256 = vdwg.mxu0
    %257 = vmatpush.msra.mxu0 %v226
    %258 = vmatpush.msra.mxu0 %v224
    %259 = vmatpush.msra.mxu0 %v222
    %260 = vmatpush.msra.mxu0 %v220
    %261 = vmatpush.msra.mxu0 %v218
    %262 = vmatpush.msra.mxu0 %v216
    %263 = vmatpush.msra.mxu0 %v214
    %264 = vmatpush.msra.mxu0 %v212
    %265 = vmatpush.msra.mxu0 %v210
    %266 = vmatpush.msra.mxu0 %v208
    %267 = vmatpush.msra.mxu0 %v206
    %268 = vmatpush.msra.mxu0 %v204
    %269 = vmatpush.msra.mxu0 %v202
    %270 = vmatpush.msra.mxu0 %v200
    %271 = vmatpush.msra.mxu0 %v198
    %272 = vmatpush.msra.mxu0 %v196
    %273 = vmatmul.f32.gmra.mxu0 %v192
    %v274 = vpop.f32.mrf.mxu0
    %v275 = vadd.f32 %v231, %v274
    %276 = vmatmul.f32.gmra.mxu0 %v193
    %v277 = vpop.f32.mrf.mxu0
    %v278 = vadd.f32 %v231, %v277
    %279 = vdwg.mxu0
    %v280 = vmax.f32 %v252, 0.0
    %v281 = vmax.f32 %v255, 0.0
    %v282 = vxor.u32 %v275, 2147483648
    %v283 = vxor.u32 %v278, 2147483648
    %v284 = vmul.f32 %v282, 1.442695
    %v285 = vpow.pop %v284
    %v286 = vmul.f32 %v283, 1.442695
    %v287 = vpow.pop %v286
    %v288 = vadd.f32 %v285, 1.0
    %v289 = vadd.f32 %v287, 1.0
    %v290 = vrcp.pop %v288
    %v291 = vmul.f32 %v288, %v290
    %v292 = vsub.f32 1.0, %v291
    %v293 = vmul.f32 %v290, %v292
    %v294 = vadd.f32 %v290, %v293
    %vm295 = vweird.f32 %v288
    %vm296 = vweird.f32 %v290
    %vm297 = vmor %vm295, %vm296
    %v298 = vsel %vm297, %v290, %v294
    %v299 = vand.u32 2147483647, %v288
    %vm300 = vcmp.eq.f32.partialorder %v299, 8.507059e+37
    %v301 = vand.u32 %v288, 2147483648
    %v302 = vor.u32 1.1754944e-38, %v301
    %v303 = vsel %vm300, %v302, %v298
    %v304 = vmul.f32 1.0, %v303
    %v305 = vrcp.pop %v289
    %v306 = vmul.f32 %v289, %v305
    %v307 = vsub.f32 1.0, %v306
    %v308 = vmul.f32 %v305, %v307
    %v309 = vadd.f32 %v305, %v308
    %vm310 = vweird.f32 %v289
    %vm311 = vweird.f32 %v305
    %vm312 = vmor %vm310, %vm311
    %v313 = vsel %vm312, %v305, %v309
    %v314 = vand.u32 2147483647, %v289
    %vm315 = vcmp.eq.f32.partialorder %v314, 8.507059e+37
    %v316 = vand.u32 %v289, 2147483648
    %v317 = vor.u32 1.1754944e-38, %v316
    %v318 = vsel %vm315, %v317, %v313
    %v319 = vmul.f32 1.0, %v318
    %v320 = vsub.f32 %v280, %v192
    %v321 = vsub.f32 %v281, %v193
    %v322 = vmul.f32 %v304, %v320
    %v323 = vmul.f32 %v319, %v321
    %v324 = vadd.f32 %v192, %v322
    %v325 = vadd.f32 %v193, %v323
    %326 = vst [vmem:[#allocation8] sm:$0xff] %v324
    %327 = vst [vmem:[#allocation8 + $0x8] sm:$0xff] %v325
    // Predicated region
    $region26: #{tpu_custom_call.1} parent=1 // pred_check
      _
    $region27: #{tpu_custom_call.1} parent=1 // pred_check_branch
      %329 = sbr.rel (0) target = $region29
    $region28: #{tpu_custom_call.1} parent=1 // pred_region
      %331 = vsyncadd [#allocation4], 0
      %s332 = sshll.u32 [#allocation8], 4
      %s333 = int_to_ptr.vmem [resolvable:$true] %s332
      %s334 = sshll.u32 %s3, 4
      %s335 = int_to_ptr.hbm [resolvable:$true] %s334
      %340 = dma.vmem_to_hbm [thread:$0]  %s333, 256, %s335, [#allocation4], 128, 128, 8
    $region29: #{tpu_custom_call.1} parent=1 // pred_fallthru
      _
    // Predicated region
    $region30: #{tpu_custom_call.1} parent=1 // pred_check
      _
    $region31: #{tpu_custom_call.1} parent=1 // pred_check_branch
      %342 = sbr.rel (0) target = $region33
    $region32: #{tpu_custom_call.1} parent=1 // pred_region
      %344 = dma.done [#allocation4], 256
    $region33: #{tpu_custom_call.1} parent=1 // pred_fallthru
      _
    %345 = vsyncpa [#allocation3], 1
    %346 = vsyncpa [#allocation6], 1
    %347 = vsyncpa [#allocation4], 1

</llo_original>
